<compile_context>
chip_gen: v6e
topology: v6e:2x2x1
jax: 0.10.0
libtpu: 0.0.40
codegen_flags: <defaults>
</compile_context>

<pallas_src>
import jax
import jax.numpy as jnp
from jax.experimental import pallas as pl
from jax.experimental.pallas import tpu as pltpu


_TARGET_TILE_B = 8192      # ~1 MiB of f32 z per grid step -> amortizes the ~0.35us/step
                           # pipeline overhead on all generations.  With the lane-dense
                           # output this can be raised to 16-32K on v7x via the tile_b knob.
_MIN_SPLIT_TILE_B = 512    # smallest per-step tile we bother splitting into (2-TC v7x)
_MIN_PALLAS_BATCH = 1024   # below this (and tile_b unspecified) fall back to plain XLA


def _round_up(x, m):
    return ((x + m - 1) // m) * m


def _pick_tiling(B, tile_b):
    """Return (tile_b, b_pad, n_steps) satisfying TPU block-shape constraints.

    Multi-step grids use a tile_b that is a multiple of 128 so the transposed
    (target, tile_b) output block is lane-dense; a single-step grid only needs
    the sublane (8) constraint.  Padding is therefore bounded by ~128 * n_steps
    rows instead of tile_b - 1.
    """
    if tile_b is None:
        n_steps = pl.cdiv(B, _TARGET_TILE_B)
        if n_steps == 1 and B >= 2 * _MIN_SPLIT_TILE_B:
            n_steps = 2                       # give v7x's two TensorCores a split
        if n_steps > 1 and n_steps % 2:
            n_steps += 1                      # even step count -> balanced 2-TC sharding
        tile_b = pl.cdiv(B, n_steps)
    tile_b = max(8, _round_up(int(tile_b), 8))   # defensive: sublane constraint
    if tile_b < B:
        tile_b = _round_up(tile_b, 128)          # lane-dense transposed output blocks
    if tile_b >= B:
        tile_b = _round_up(B, 8)                 # single full-extent block
    b_pad = _round_up(B, tile_b)
    return tile_b, b_pad, b_pad // tile_b


def _classifier_kernel(z_ref,
                       w12_ref, b12_ref,
                       w3_ref, b3_ref,
                       w4_ref, b4_ref,
                       ot_ref):
    # linear2(linear1(z)) with the two layers algebraically folded into (w12, b12)
    # outside the kernel (no activation between them in the module), then ReLU.
    h = jnp.dot(z_ref[...], w12_ref[...], preferred_element_type=jnp.float32)
    h = jnp.maximum(h + b12_ref[...], 0.0)
    # relu(linear3)
    h = jnp.dot(h.astype(w3_ref.dtype), w3_ref[...], preferred_element_type=jnp.float32)
    h = jnp.maximum(h + b3_ref[...], 0.0)
    # linear4 logits, transposed to (target, tile_b) so every store is a full-width,
    # unmasked vst (target=3 would otherwise be a masked 12-byte row store and a 42x
    # lane-padded output block).  The transpose rides the XLU slot, which is idle here.
    logits = jnp.dot(h.astype(w4_ref.dtype), w4_ref[...], preferred_element_type=jnp.float32)
    logits_t = (logits + b4_ref[...]).T
    # sigmoid: exp on the EUP + exact reciprocal (also EUP-backed, effectively free).
    ot_ref[...] = pl.reciprocal(1.0 + jnp.exp(-logits_t), approx=False).astype(ot_ref.dtype)


def classifier_forward(z, params, *, tile_b=None):
    """z: (B, embedding_dim); params: w1..w4 as (in, out), b1..b4 as (1, out).

    Returns (B, target_number) f32 probabilities, matching the PyTorch module.
    """
    B, emb = z.shape
    target = params["w4"].shape[1]

    # Tiny batches: a single tiny grid step can't amortize custom-call overhead,
    # so use the plain XLA path unless the caller forces the kernel via tile_b.
    if tile_b is None and B < _MIN_PALLAS_BATCH:
        return _reference_forward(z, params)

    # Fold linear1 into linear2 (valid: the module applies no activation between them):
    #   relu((z @ w1 + b1) @ w2 + b2) == relu(z @ (w1 @ w2) + (b1 @ w2 + b2))
    # One-time fold -> do it at highest precision so it doesn't perturb every input.
    hp = jax.lax.Precision.HIGHEST
    w12 = jnp.dot(params["w1"], params["w2"], precision=hp,
                  preferred_element_type=jnp.float32)
    b12 = jnp.dot(params["b1"], params["w2"], precision=hp,
                  preferred_element_type=jnp.float32) + params["b2"]

    # MXU input dtype follows z (bf16 z halves the dominant HBM traffic); biases and
    # accumulation stay f32.  No standalone cast of z is ever inserted.
    cdt = z.dtype
    weights = (w12.astype(cdt), b12.astype(jnp.float32),
               params["w3"].astype(cdt), params["b3"].astype(jnp.float32),
               params["w4"].astype(cdt), params["b4"].astype(jnp.float32))

    tile_b, b_pad, n_steps = _pick_tiling(B, tile_b)
    z_p = jnp.pad(z, ((0, b_pad - B), (0, 0))) if b_pad != B else z

    def resident(a):
        # Constant index_map -> block never changes -> weights stay VMEM-resident.
        return pl.BlockSpec(a.shape, lambda i: (0, 0))

    h1 = w12.shape[1]
    flops = 2 * b_pad * (emb * h1 + h1 * 10 + 10 * target)
    bytes_accessed = (b_pad * emb * z.dtype.itemsize
                      + b_pad * target * 4
                      + sum(int(a.size) * a.dtype.itemsize for a in weights))

    out_t = pl.pallas_call(
        _classifier_kernel,
        out_shape=jax.ShapeDtypeStruct((target, b_pad), jnp.float32),
        grid=(n_steps,),
        in_specs=[pl.BlockSpec((tile_b, emb), lambda i: (i, 0))]
                 + [resident(a) for a in weights],
        out_specs=pl.BlockSpec((target, tile_b), lambda i: (0, i)),
        compiler_params=pltpu.CompilerParams(
            dimension_semantics=("parallel",),
            vmem_limit_bytes=48 * 1024 * 1024),
        cost_estimate=pl.CostEstimate(
            flops=flops,
            transcendentals=b_pad * target,
            bytes_accessed=bytes_accessed),
    )(z_p, *weights)

    out = out_t.T  # tiny epilogue transpose; keeps the kernel's stores lane-dense
    return out[:B] if b_pad != B else out


def init_classifier_params(key, embedding_dim, hidden_dim, target_number):
    """Deterministic init matching the nn.Linear shapes of the module.

    Weights generated in PyTorch layout (out, in), then transposed to (in, out)
    for the kernel; biases stored as (1, out) for 2-D broadcast on TPU.
    """
    dims = [(embedding_dim, hidden_dim[0]),
            (hidden_dim[0], hidden_dim[1]),
            (hidden_dim[1], 10),
            (10, target_number)]
    params = {}
    keys = jax.random.split(key, 2 * len(dims))
    for i, (fan_in, fan_out) in enumerate(dims):
        bound = 1.0 / jnp.sqrt(fan_in)
        w = jax.random.uniform(keys[2 * i], (fan_out, fan_in),
                               minval=-bound, maxval=bound, dtype=jnp.float32)
        b = jax.random.uniform(keys[2 * i + 1], (fan_out,),
                               minval=-bound, maxval=bound, dtype=jnp.float32)
        params[f"w{i+1}"] = jnp.transpose(w)          # (in, out)
        params[f"b{i+1}"] = b.reshape(1, fan_out)     # (1, out)
    return params


def _reference_forward(z, params):
    """Unfused 4-layer reference (matches the PyTorch module exactly)."""
    h = z @ params["w1"] + params["b1"]
    h = jnp.maximum(h @ params["w2"] + params["b2"], 0.0)
    h = jnp.maximum(h @ params["w3"] + params["b3"], 0.0)
    return jax.nn.sigmoid(h @ params["w4"] + params["b4"])


if __name__ == "__main__":
    embedding_dim = 32
    hidden_dim = [64, 32]
    target_number = 3

    key = jax.random.PRNGKey(0)
    k_params, k_z1, k_z2, k_z3 = jax.random.split(key, 4)
    params = init_classifier_params(k_params, embedding_dim, hidden_dim, target_number)

    # 1) Small batch, Pallas kernel forced via explicit tile_b (single-block grid).
    z1 = jax.random.normal(k_z1, (8, embedding_dim), dtype=jnp.float32)
    out1 = classifier_forward(z1, params, tile_b=8)
    jax.block_until_ready(out1)
    ref1 = _reference_forward(z1, params)
    assert out1.shape == (8, target_number)
    assert jnp.allclose(out1, ref1, atol=2e-3, rtol=2e-3), float(jnp.max(jnp.abs(out1 - ref1)))

    # 2) Non-multiple batch, multi-step grid: padding + lane-dense transposed output.
    z2 = jax.random.normal(k_z2, (517, embedding_dim), dtype=jnp.float32)
    out2 = classifier_forward(z2, params, tile_b=128)
    jax.block_until_ready(out2)
    ref2 = _reference_forward(z2, params)
    assert out2.shape == (517, target_number)
    assert jnp.allclose(out2, ref2, atol=2e-3, rtol=2e-3)

    # 3) Auto-tiling path: adaptive tile, even (>=2) step count for v7x 2-TC sharding.
    z3 = jax.random.normal(k_z3, (1536, embedding_dim), dtype=jnp.float32)
    out3 = classifier_forward(z3, params)
    jax.block_until_ready(out3)
    ref3 = _reference_forward(z3, params)
    assert out3.shape == (1536, target_number)
    assert jnp.allclose(out3, ref3, atol=2e-3, rtol=2e-3)

    # 4) Tiny-batch auto dispatch falls back to plain XLA and stays correct.
    out4 = classifier_forward(z1, params)
    assert jnp.allclose(out4, ref1, atol=1e-6, rtol=1e-6)

    print("KERNEL_OK")
</pallas_src>

<mosaic_0001>
module attributes {stable_mosaic.version = 11 : i64} {
  func.func @_classifier_kernel(%arg0: i32, %arg1: memref<8x32xf32, #tpu.memory_space<vmem>>, %arg2: memref<32x32xf32, #tpu.memory_space<vmem>>, %arg3: memref<1x32xf32, #tpu.memory_space<vmem>>, %arg4: memref<32x10xf32, #tpu.memory_space<vmem>>, %arg5: memref<1x10xf32, #tpu.memory_space<vmem>>, %arg6: memref<10x3xf32, #tpu.memory_space<vmem>>, %arg7: memref<1x3xf32, #tpu.memory_space<vmem>>, %arg8: memref<3x8xf32, #tpu.memory_space<vmem>>) attributes {dimension_semantics = [#tpu.dimension_semantics<parallel>], iteration_bounds = array<i64: 1>, scalar_prefetch = 0 : i64, scratch_operands = 0 : i64, tpu.core_type = #tpu.core_type<tc>, window_params = [{transform_indices = @transform_0, window_bounds = array<i64: 8, 32>}, {pipeline_mode = #tpu.pipeline_mode<synchronous>, transform_indices = @transform_1, window_bounds = array<i64: 32, 32>}, {pipeline_mode = #tpu.pipeline_mode<synchronous>, transform_indices = @transform_2, window_bounds = array<i64: 1, 32>}, {pipeline_mode = #tpu.pipeline_mode<synchronous>, transform_indices = @transform_3, window_bounds = array<i64: 32, 10>}, {pipeline_mode = #tpu.pipeline_mode<synchronous>, transform_indices = @transform_4, window_bounds = array<i64: 1, 10>}, {pipeline_mode = #tpu.pipeline_mode<synchronous>, transform_indices = @transform_5, window_bounds = array<i64: 10, 3>}, {pipeline_mode = #tpu.pipeline_mode<synchronous>, transform_indices = @transform_6, window_bounds = array<i64: 1, 3>}, {transform_indices = @transform_7, window_bounds = array<i64: 3, 8>}]} {
    %c0 = arith.constant 0 : index
    %c0_0 = arith.constant 0 : index
    %0 = vector.load %arg1[%c0, %c0_0] : memref<8x32xf32, #tpu.memory_space<vmem>>, vector<8x32xf32>
    %c0_1 = arith.constant 0 : index
    %c0_2 = arith.constant 0 : index
    %1 = vector.load %arg2[%c0_1, %c0_2] : memref<32x32xf32, #tpu.memory_space<vmem>>, vector<32x32xf32>
    %cst = arith.constant dense<0.000000e+00> : vector<8x32xf32>
    %2 = tpu.matmul %0, %1, %cst {dimension_numbers = #tpu.dot_dimension_numbers<[1], [0], [0], [1], [0, 0, 1, 1], [], []>} : vector<8x32xf32>, vector<32x32xf32>, vector<8x32xf32> -> vector<8x32xf32>
    %c0_3 = arith.constant 0 : index
    %c0_4 = arith.constant 0 : index
    %3 = vector.load %arg3[%c0_3, %c0_4] : memref<1x32xf32, #tpu.memory_space<vmem>>, vector<1x32xf32>
    %4 = vector.broadcast %3 : vector<1x32xf32> to vector<8x32xf32>
    %5 = arith.addf %2, %4 : vector<8x32xf32>
    %cst_5 = arith.constant 0.000000e+00 : f32
    %6 = vector.broadcast %cst_5 : f32 to vector<8x32xf32>
    %7 = arith.maximumf %5, %6 : vector<8x32xf32>
    %c0_6 = arith.constant 0 : index
    %c0_7 = arith.constant 0 : index
    %8 = vector.load %arg4[%c0_6, %c0_7] : memref<32x10xf32, #tpu.memory_space<vmem>>, vector<32x10xf32>
    %cst_8 = arith.constant dense<0.000000e+00> : vector<8x10xf32>
    %9 = tpu.matmul %7, %8, %cst_8 {dimension_numbers = #tpu.dot_dimension_numbers<[1], [0], [0], [1], [0, 0, 1, 1], [], []>} : vector<8x32xf32>, vector<32x10xf32>, vector<8x10xf32> -> vector<8x10xf32>
    %c0_9 = arith.constant 0 : index
    %c0_10 = arith.constant 0 : index
    %10 = vector.load %arg5[%c0_9, %c0_10] : memref<1x10xf32, #tpu.memory_space<vmem>>, vector<1x10xf32>
    %11 = vector.broadcast %10 : vector<1x10xf32> to vector<8x10xf32>
    %12 = arith.addf %9, %11 : vector<8x10xf32>
    %cst_11 = arith.constant 0.000000e+00 : f32
    %13 = vector.broadcast %cst_11 : f32 to vector<8x10xf32>
    %14 = arith.maximumf %12, %13 : vector<8x10xf32>
    %c0_12 = arith.constant 0 : index
    %c0_13 = arith.constant 0 : index
    %15 = vector.load %arg6[%c0_12, %c0_13] : memref<10x3xf32, #tpu.memory_space<vmem>>, vector<10x3xf32>
    %cst_14 = arith.constant dense<0.000000e+00> : vector<8x3xf32>
    %16 = tpu.matmul %14, %15, %cst_14 {dimension_numbers = #tpu.dot_dimension_numbers<[1], [0], [0], [1], [0, 0, 1, 1], [], []>} : vector<8x10xf32>, vector<10x3xf32>, vector<8x3xf32> -> vector<8x3xf32>
    %c0_15 = arith.constant 0 : index
    %c0_16 = arith.constant 0 : index
    %17 = vector.load %arg7[%c0_15, %c0_16] : memref<1x3xf32, #tpu.memory_space<vmem>>, vector<1x3xf32>
    %18 = vector.broadcast %17 : vector<1x3xf32> to vector<8x3xf32>
    %19 = arith.addf %16, %18 : vector<8x3xf32>
    %20 = tpu.transpose %19, [1, 0] : vector<8x3xf32> -> vector<3x8xf32>
    %cst_17 = arith.constant 0.000000e+00 : f32
    %21 = vector.broadcast %cst_17 : f32 to vector<3x8xf32>
    %22 = arith.subf %21, %20 : vector<3x8xf32>
    %23 = math.exp %22 : vector<3x8xf32>
    %cst_18 = arith.constant 1.000000e+00 : f32
    %24 = vector.broadcast %cst_18 : f32 to vector<3x8xf32>
    %25 = arith.addf %24, %23 : vector<3x8xf32>
    %26 = tpu.reciprocal %25 : vector<3x8xf32> -> vector<3x8xf32>
    %c0_19 = arith.constant 0 : index
    %c0_20 = arith.constant 0 : index
    %27 = vector.load %arg8[%c0_19, %c0_20] : memref<3x8xf32, #tpu.memory_space<vmem>>, vector<3x8xf32>
    tpu.vector_store %arg8[%c0_19, %c0_20], %26 {strides = array<i32>} : memref<3x8xf32, #tpu.memory_space<vmem>>, vector<3x8xf32>,
    return
  }
  func.func @transform_0(%arg0: i32) -> (i32, i32) {
    %c0_i32 = arith.constant 0 : i32
    %c0_i32_0 = arith.constant 0 : i32
    return %arg0, %c0_i32 : i32, i32
  }
  func.func @transform_1(%arg0: i32) -> (i32, i32) {
    %c0_i32 = arith.constant 0 : i32
    %c0_i32_0 = arith.constant 0 : i32
    %c0_i32_1 = arith.constant 0 : i32
    return %c0_i32, %c0_i32_0 : i32, i32
  }
  func.func @transform_2(%arg0: i32) -> (i32, i32) {
    %c0_i32 = arith.constant 0 : i32
    %c0_i32_0 = arith.constant 0 : i32
    %c0_i32_1 = arith.constant 0 : i32
    return %c0_i32, %c0_i32_0 : i32, i32
  }
  func.func @transform_3(%arg0: i32) -> (i32, i32) {
    %c0_i32 = arith.constant 0 : i32
    %c0_i32_0 = arith.constant 0 : i32
    %c0_i32_1 = arith.constant 0 : i32
    return %c0_i32, %c0_i32_0 : i32, i32
  }
  func.func @transform_4(%arg0: i32) -> (i32, i32) {
    %c0_i32 = arith.constant 0 : i32
    %c0_i32_0 = arith.constant 0 : i32
    %c0_i32_1 = arith.constant 0 : i32
    return %c0_i32, %c0_i32_0 : i32, i32
  }
  func.func @transform_5(%arg0: i32) -> (i32, i32) {
    %c0_i32 = arith.constant 0 : i32
    %c0_i32_0 = arith.constant 0 : i32
    %c0_i32_1 = arith.constant 0 : i32
    return %c0_i32, %c0_i32_0 : i32, i32
  }
  func.func @transform_6(%arg0: i32) -> (i32, i32) {
    %c0_i32 = arith.constant 0 : i32
    %c0_i32_0 = arith.constant 0 : i32
    %c0_i32_1 = arith.constant 0 : i32
    return %c0_i32, %c0_i32_0 : i32, i32
  }
  func.func @transform_7(%arg0: i32) -> (i32, i32) {
    %c0_i32 = arith.constant 0 : i32
    %c0_i32_0 = arith.constant 0 : i32
    return %c0_i32, %arg0 : i32, i32
  }
}

</mosaic_0001>

<llo_original>
// kernel: tpu_custom_call.1
$region0: #{tpu_custom_call.1}
  #allocation0 [shape = 'u32[]', space=smem, size = 0x4, offset = 0x4, fixed_abs, tag = 'smem constant byte address 0x4 - core index']
  #allocation1 [shape = 'u32[144,128]{1,0:T(1,128)}', space=vmem, size = 0x12000, scoped, tag = 'internal scratch']
  %s0 = inlined_call_operand.vmem [shape: f32[8,32], index: 0, kind: input, shape index: {}]
  %s1 = inlined_call_operand.vmem [shape: f32[32,32], index: 1, kind: input, shape index: {}]
  %s2 = inlined_call_operand.vmem [shape: f32[1,32], index: 2, kind: input, shape index: {}]
  %s3 = inlined_call_operand.vmem [shape: f32[32,10], index: 3, kind: input, shape index: {}]
  %s4 = inlined_call_operand.vmem [shape: f32[1,10], index: 4, kind: input, shape index: {}]
  %s5 = inlined_call_operand.vmem [shape: f32[10,3], index: 5, kind: input, shape index: {}]
  %s6 = inlined_call_operand.vmem [shape: f32[1,3], index: 6, kind: input, shape index: {}]
  %s7 = inlined_call_operand.hbm [shape: f32[3,8], index: 7, kind: output, shape index: {}]
  %s8 = sld [smem:[#allocation0]]
  $region38: #{tpu_custom_call.1} parent=0
    _
  %s10 = ssub.s32 1, %s8
  %s11 = scalar_select 0, %s10, %s8
  $region1: #{tpu_custom_call.1} parent=0
    #allocation2 [shape = 'u8[2048]{0}', space=vmem, size = 0x800, scoped, tag = 'output window, operand 0, single buffered']
    #allocation3 [shape = 's32[1]{0}', space=sflag, size = 0x4, scoped, tag = 'scoped memory for tpu_custom_call.1']
    %12 = vsyncpa [#allocation3], 0
    // Predicated region
    $region2: #{tpu_custom_call.1} parent=1 // pred_check
      _
    $region3: #{tpu_custom_call.1} parent=1 // pred_check_branch
      %14 = sbr.rel (0) target = $region5
    $region4: #{tpu_custom_call.1} parent=1 // pred_region
      _
    $region5: #{tpu_custom_call.1} parent=1 // pred_fallthru
      _
    // Predicated region
    $region6: #{tpu_custom_call.1} parent=1 // pred_check
      _
    $region7: #{tpu_custom_call.1} parent=1 // pred_check_branch
      %16 = sbr.rel (0) target = $region9
    $region8: #{tpu_custom_call.1} parent=1 // pred_region
      _
    $region9: #{tpu_custom_call.1} parent=1 // pred_fallthru
      _
    // Predicated region
    $region10: #{tpu_custom_call.1} parent=1 // pred_check
      _
    $region11: #{tpu_custom_call.1} parent=1 // pred_check_branch
      %18 = sbr.rel (0) target = $region13
    $region12: #{tpu_custom_call.1} parent=1 // pred_region
      _
    $region13: #{tpu_custom_call.1} parent=1 // pred_fallthru
      _
    // Predicated region
    $region14: #{tpu_custom_call.1} parent=1 // pred_check
      _
    $region15: #{tpu_custom_call.1} parent=1 // pred_check_branch
      %20 = sbr.rel (0) target = $region17
    $region16: #{tpu_custom_call.1} parent=1 // pred_region
      _
    $region17: #{tpu_custom_call.1} parent=1 // pred_fallthru
      _
    // Predicated region
    $region18: #{tpu_custom_call.1} parent=1 // pred_check
      _
    $region19: #{tpu_custom_call.1} parent=1 // pred_check_branch
      %22 = sbr.rel (0) target = $region21
    $region20: #{tpu_custom_call.1} parent=1 // pred_region
      _
    $region21: #{tpu_custom_call.1} parent=1 // pred_fallthru
      _
    // Predicated region
    $region22: #{tpu_custom_call.1} parent=1 // pred_check
      _
    $region23: #{tpu_custom_call.1} parent=1 // pred_check_branch
      %24 = sbr.rel (0) target = $region25
    $region24: #{tpu_custom_call.1} parent=1 // pred_region
      _
    $region25: #{tpu_custom_call.1} parent=1 // pred_fallthru
      _
    // Predicated region
    $region26: #{tpu_custom_call.1} parent=1 // pred_check
      _
    $region27: #{tpu_custom_call.1} parent=1 // pred_check_branch
      %26 = sbr.rel (0) target = $region29
    $region28: #{tpu_custom_call.1} parent=1 // pred_region
      _
    $region29: #{tpu_custom_call.1} parent=1 // pred_fallthru
      _
    %v27 = vld [vmem:[%s0] sm:$0xff]
    %v28 = vld [vmem:[%s1] sm:$0xff]
    %v29 = vld [vmem:[%s1 + $0x8] sm:$0xff]
    %v30 = vld [vmem:[%s1 + $0x10] sm:$0xff]
    %v31 = vld [vmem:[%s1 + $0x18] sm:$0xff]
    %v32 = vld [vmem:[%s2] sm:$0x1]
    %v34 = vlaneseq
    %v35 = vshrl.u32 %v34, 7
    %v36 = vsub.s32 0, %v35
    %v37 = vrot.slane %v32, %v36
    %vm39 = vcmask 261120
    %v41 = vsel %vm39, %v27, 0
    %43 = vmatprep.subr.mxu0 0.0
    %44 = vmatpush1.msra.mxu0 0.0
    %45 = vmatprep.subr.mxu0 0.0
    %46 = vmatpush1.msra.mxu0 0.0
    %47 = vmatprep.subr.mxu0 0.0
    %48 = vmatpush1.msra.mxu0 0.0
    %49 = vmatprep.subr.mxu0 0.0
    %50 = vmatpush1.msra.mxu0 0.0
    %51 = vmatprep.subr.mxu0 0.0
    %52 = vmatpush1.msra.mxu0 0.0
    %53 = vmatprep.subr.mxu0 0.0
    %54 = vmatpush1.msra.mxu0 0.0
    %55 = vmatprep.subr.mxu0 0.0
    %56 = vmatpush1.msra.mxu0 0.0
    %57 = vmatprep.subr.mxu0 0.0
    %58 = vmatpush1.msra.mxu0 0.0
    %59 = vmatprep.subr.mxu0 0.0
    %60 = vmatpush1.msra.mxu0 0.0
    %61 = vmatprep.subr.mxu0 0.0
    %62 = vmatpush1.msra.mxu0 0.0
    %63 = vmatprep.subr.mxu0 0.0
    %64 = vmatpush1.msra.mxu0 0.0
    %65 = vmatprep.subr.mxu0 0.0
    %66 = vmatpush1.msra.mxu0 0.0
    %67 = vmatprep.subr.mxu0 0.0
    %68 = vmatpush1.msra.mxu0 %v31
    %69 = vmatprep.subr.mxu0 0.0
    %70 = vmatpush1.msra.mxu0 %v30
    %71 = vmatprep.subr.mxu0 0.0
    %72 = vmatpush1.msra.mxu0 %v29
    %73 = vmatprep.subr.mxu0 0.0
    %74 = vmatpush1.msra.mxu0 %v28
    %75 = vmatprep.subr.mxu0 0.0
    %76 = vmatpush2.msra.mxu0 0.0
    %77 = vmatprep.subr.mxu0 0.0
    %78 = vmatpush2.msra.mxu0 0.0
    %79 = vmatprep.subr.mxu0 0.0
    %80 = vmatpush2.msra.mxu0 0.0
    %81 = vmatprep.subr.mxu0 0.0
    %82 = vmatpush2.msra.mxu0 0.0
    %83 = vmatprep.subr.mxu0 0.0
    %84 = vmatpush2.msra.mxu0 0.0
    %85 = vmatprep.subr.mxu0 0.0
    %86 = vmatpush2.msra.mxu0 0.0
    %87 = vmatprep.subr.mxu0 0.0
    %88 = vmatpush2.msra.mxu0 0.0
    %89 = vmatprep.subr.mxu0 0.0
    %90 = vmatpush2.msra.mxu0 0.0
    %91 = vmatprep.subr.mxu0 0.0
    %92 = vmatpush2.msra.mxu0 0.0
    %93 = vmatprep.subr.mxu0 0.0
    %94 = vmatpush2.msra.mxu0 0.0
    %95 = vmatprep.subr.mxu0 0.0
    %96 = vmatpush2.msra.mxu0 0.0
    %97 = vmatprep.subr.mxu0 0.0
    %98 = vmatpush2.msra.mxu0 0.0
    %99 = vmatprep.subr.mxu0 0.0
    %100 = vmatpush2.msra.mxu0 0.0
    %101 = vmatprep.subr.mxu0 0.0
    %102 = vmatpush2.msra.mxu0 0.0
    %103 = vmatprep.subr.mxu0 0.0
    %104 = vmatpush2.msra.mxu0 0.0
    %105 = vmatprep.subr.mxu0 0.0
    %106 = vmatpush2.msra.mxu0 0.0
    %107 = vmatprep.mubr.f32.mxu0 0.0
    %108 = vmatmul.mubr.f32.gmra.mxu0 %v41
    %v109 = vpop.f32.mrf.mxu0
    %v110 = vadd.f32 %v37, %v109
    %v111 = vpop.f32.mrf.mxu0
    %112 = vdwg.mxu0
    %v113 = vmax.f32 %v110, 0.0
    %v114 = vld [vmem:[%s3] sm:$0xff]
    %v115 = vld [vmem:[%s3 + $0x8] sm:$0xff]
    %v116 = vld [vmem:[%s3 + $0x10] sm:$0xff]
    %v117 = vld [vmem:[%s3 + $0x18] sm:$0xff]
    %v118 = vld [vmem:[%s4] sm:$0x1]
    %v120 = vlaneseq
    %v121 = vshrl.u32 %v120, 7
    %v122 = vsub.s32 0, %v121
    %v123 = vrot.slane %v118, %v122
    %v126 = vsel %vm39, %v113, 0
    %128 = vmatprep.subr.mxu0 0.0
    %129 = vmatpush1.msra.mxu0 0.0
    %130 = vmatprep.subr.mxu0 0.0
    %131 = vmatpush1.msra.mxu0 0.0
    %132 = vmatprep.subr.mxu0 0.0
    %133 = vmatpush1.msra.mxu0 0.0
    %134 = vmatprep.subr.mxu0 0.0
    %135 = vmatpush1.msra.mxu0 0.0
    %136 = vmatprep.subr.mxu0 0.0
    %137 = vmatpush1.msra.mxu0 0.0
    %138 = vmatprep.subr.mxu0 0.0
    %139 = vmatpush1.msra.mxu0 0.0
    %140 = vmatprep.subr.mxu0 0.0
    %141 = vmatpush1.msra.mxu0 0.0
    %142 = vmatprep.subr.mxu0 0.0
    %143 = vmatpush1.msra.mxu0 0.0
    %144 = vmatprep.subr.mxu0 0.0
    %145 = vmatpush1.msra.mxu0 0.0
    %146 = vmatprep.subr.mxu0 0.0
    %147 = vmatpush1.msra.mxu0 0.0
    %148 = vmatprep.subr.mxu0 0.0
    %149 = vmatpush1.msra.mxu0 0.0
    %150 = vmatprep.subr.mxu0 0.0
    %151 = vmatpush1.msra.mxu0 0.0
    %152 = vmatprep.subr.mxu0 0.0
    %153 = vmatpush1.msra.mxu0 %v117
    %154 = vmatprep.subr.mxu0 0.0
    %155 = vmatpush1.msra.mxu0 %v116
    %156 = vmatprep.subr.mxu0 0.0
    %157 = vmatpush1.msra.mxu0 %v115
    %158 = vmatprep.subr.mxu0 0.0
    %159 = vmatpush1.msra.mxu0 %v114
    %160 = vmatprep.subr.mxu0 0.0
    %161 = vmatpush2.msra.mxu0 0.0
    %162 = vmatprep.subr.mxu0 0.0
    %163 = vmatpush2.msra.mxu0 0.0
    %164 = vmatprep.subr.mxu0 0.0
    %165 = vmatpush2.msra.mxu0 0.0
    %166 = vmatprep.subr.mxu0 0.0
    %167 = vmatpush2.msra.mxu0 0.0
    %168 = vmatprep.subr.mxu0 0.0
    %169 = vmatpush2.msra.mxu0 0.0
    %170 = vmatprep.subr.mxu0 0.0
    %171 = vmatpush2.msra.mxu0 0.0
    %172 = vmatprep.subr.mxu0 0.0
    %173 = vmatpush2.msra.mxu0 0.0
    %174 = vmatprep.subr.mxu0 0.0
    %175 = vmatpush2.msra.mxu0 0.0
    %176 = vmatprep.subr.mxu0 0.0
    %177 = vmatpush2.msra.mxu0 0.0
    %178 = vmatprep.subr.mxu0 0.0
    %179 = vmatpush2.msra.mxu0 0.0
    %180 = vmatprep.subr.mxu0 0.0
    %181 = vmatpush2.msra.mxu0 0.0
    %182 = vmatprep.subr.mxu0 0.0
    %183 = vmatpush2.msra.mxu0 0.0
    %184 = vmatprep.subr.mxu0 0.0
    %185 = vmatpush2.msra.mxu0 0.0
    %186 = vmatprep.subr.mxu0 0.0
    %187 = vmatpush2.msra.mxu0 0.0
    %188 = vmatprep.subr.mxu0 0.0
    %189 = vmatpush2.msra.mxu0 0.0
    %190 = vmatprep.subr.mxu0 0.0
    %191 = vmatpush2.msra.mxu0 0.0
    %192 = vmatprep.mubr.f32.mxu0 0.0
    %193 = vmatmul.mubr.f32.gmra.mxu0 %v126
    %v194 = vpop.f32.mrf.mxu0
    %v195 = vadd.f32 %v123, %v194
    %v196 = vpop.f32.mrf.mxu0
    %197 = vdwg.mxu0
    %v198 = vmax.f32 %v195, 0.0
    %v199 = vld [vmem:[%s5] sm:$0xff]
    %v200 = vld [vmem:[%s5 + $0x8] sm:$0x3]
    %v201 = vld [vmem:[%s6] sm:$0x1]
    %v203 = vlaneseq
    %v204 = vshrl.u32 %v203, 7
    %v205 = vsub.s32 0, %v204
    %v206 = vrot.slane %v201, %v205
    %vm208 = vcmask 80896
    %v210 = vsel %vm208, %v198, 0
    %vm212 = vcmask 1041408
    %v214 = vsel %vm212, %v200, 0
    %216 = vmatprep.subr.mxu0 0.0
    %217 = vmatpush1.msra.mxu0 0.0
    %218 = vmatprep.subr.mxu0 0.0
    %219 = vmatpush1.msra.mxu0 0.0
    %220 = vmatprep.subr.mxu0 0.0
    %221 = vmatpush1.msra.mxu0 0.0
    %222 = vmatprep.subr.mxu0 0.0
    %223 = vmatpush1.msra.mxu0 0.0
    %224 = vmatprep.subr.mxu0 0.0
    %225 = vmatpush1.msra.mxu0 0.0
    %226 = vmatprep.subr.mxu0 0.0
    %227 = vmatpush1.msra.mxu0 0.0
    %228 = vmatprep.subr.mxu0 0.0
    %229 = vmatpush1.msra.mxu0 0.0
    %230 = vmatprep.subr.mxu0 0.0
    %231 = vmatpush1.msra.mxu0 0.0
    %232 = vmatprep.subr.mxu0 0.0
    %233 = vmatpush1.msra.mxu0 0.0
    %234 = vmatprep.subr.mxu0 0.0
    %235 = vmatpush1.msra.mxu0 0.0
    %236 = vmatprep.subr.mxu0 0.0
    %237 = vmatpush1.msra.mxu0 0.0
    %238 = vmatprep.subr.mxu0 0.0
    %239 = vmatpush1.msra.mxu0 0.0
    %240 = vmatprep.subr.mxu0 0.0
    %241 = vmatpush1.msra.mxu0 0.0
    %242 = vmatprep.subr.mxu0 0.0
    %243 = vmatpush1.msra.mxu0 0.0
    %244 = vmatprep.subr.mxu0 0.0
    %245 = vmatpush1.msra.mxu0 %v214
    %246 = vmatprep.subr.mxu0 0.0
    %247 = vmatpush1.msra.mxu0 %v199
    %248 = vmatprep.subr.mxu0 0.0
    %249 = vmatpush2.msra.mxu0 0.0
    %250 = vmatprep.subr.mxu0 0.0
    %251 = vmatpush2.msra.mxu0 0.0
    %252 = vmatprep.subr.mxu0 0.0
    %253 = vmatpush2.msra.mxu0 0.0
    %254 = vmatprep.subr.mxu0 0.0
    %255 = vmatpush2.msra.mxu0 0.0
    %256 = vmatprep.subr.mxu0 0.0
    %257 = vmatpush2.msra.mxu0 0.0
    %258 = vmatprep.subr.mxu0 0.0
    %259 = vmatpush2.msra.mxu0 0.0
    %260 = vmatprep.subr.mxu0 0.0
    %261 = vmatpush2.msra.mxu0 0.0
    %262 = vmatprep.subr.mxu0 0.0
    %263 = vmatpush2.msra.mxu0 0.0
    %264 = vmatprep.subr.mxu0 0.0
    %265 = vmatpush2.msra.mxu0 0.0
    %266 = vmatprep.subr.mxu0 0.0
    %267 = vmatpush2.msra.mxu0 0.0
    %268 = vmatprep.subr.mxu0 0.0
    %269 = vmatpush2.msra.mxu0 0.0
    %270 = vmatprep.subr.mxu0 0.0
    %271 = vmatpush2.msra.mxu0 0.0
    %272 = vmatprep.subr.mxu0 0.0
    %273 = vmatpush2.msra.mxu0 0.0
    %274 = vmatprep.subr.mxu0 0.0
    %275 = vmatpush2.msra.mxu0 0.0
    %276 = vmatprep.subr.mxu0 0.0
    %277 = vmatpush2.msra.mxu0 0.0
    %278 = vmatprep.subr.mxu0 0.0
    %279 = vmatpush2.msra.mxu0 0.0
    %280 = vmatprep.mubr.f32.mxu0 0.0
    %281 = vmatmul.mubr.f32.gmra.mxu0 %v210
    %v282 = vpop.f32.mrf.mxu0
    %v283 = vadd.f32 %v206, %v282
    %v284 = vpop.f32.mrf.mxu0
    %285 = vdwg.mxu0
    %286 = vxpose.xlu0.b32.start [1/16] %v283, 128
    %287 = vxpose.xlu0.b32.cont [2/16] 0.0, 128
    %288 = vxpose.xlu0.b32.cont [3/16] 0.0, 128
    %289 = vxpose.xlu0.b32.cont [4/16] 0.0, 128
    %290 = vxpose.xlu0.b32.cont [5/16] 0.0, 128
    %291 = vxpose.xlu0.b32.cont [6/16] 0.0, 128
    %292 = vxpose.xlu0.b32.cont [7/16] 0.0, 128
    %293 = vxpose.xlu0.b32.cont [8/16] 0.0, 128
    %294 = vxpose.xlu0.b32.cont [9/16] 0.0, 128
    %295 = vxpose.xlu0.b32.cont [10/16] 0.0, 128
    %296 = vxpose.xlu0.b32.cont [11/16] 0.0, 128
    %297 = vxpose.xlu0.b32.cont [12/16] 0.0, 128
    %298 = vxpose.xlu0.b32.cont [13/16] 0.0, 128
    %299 = vxpose.xlu0.b32.cont [14/16] 0.0, 128
    %300 = vxpose.xlu0.b32.cont [15/16] 0.0, 128
    %301 = vxpose.xlu0.b32.end [16/16] 0.0, 128
    %v302 = vpop.trf.xlu0
    %v303 = vpop.trf.xlu0
    %v304 = vpop.trf.xlu0
    %v305 = vpop.trf.xlu0
    %v306 = vpop.trf.xlu0
    %v307 = vpop.trf.xlu0
    %v308 = vpop.trf.xlu0
    %v309 = vpop.trf.xlu0
    %v310 = vpop.trf.xlu0
    %v311 = vpop.trf.xlu0
    %v312 = vpop.trf.xlu0
    %v313 = vpop.trf.xlu0
    %v314 = vpop.trf.xlu0
    %v315 = vpop.trf.xlu0
    %v316 = vpop.trf.xlu0
    %v317 = vpop.trf.xlu0
    %v318 = vsub.f32 0.0, %v302
    %v319 = vmul.f32 %v318, 1.442695
    %v320 = vpow.pop %v319
    %v321 = vadd.f32 %v320, 1.0
    %v322 = vrcp.pop %v321
    %vm323 = vcmask 59392
    %324 = vst.msk [vmem:[#allocation2] sm:$0x7] %vm323, %v322
    // Predicated region
    $region30: #{tpu_custom_call.1} parent=1 // pred_check
      _
    $region31: #{tpu_custom_call.1} parent=1 // pred_check_branch
      %326 = sbr.rel (0) target = $region33
    $region32: #{tpu_custom_call.1} parent=1 // pred_region
      %s328 = ssub.s32 64, 64
      %329 = vsyncadd [#allocation3], %s328
      %s331 = sshll.u32 [#allocation2], 4
      %s332 = int_to_ptr.vmem [resolvable:$true] %s331
      %334 = dma.vmem_to_hbm [thread:$0]  %s332, 64, %s7, [#allocation3]
    $region33: #{tpu_custom_call.1} parent=1 // pred_fallthru
      _
    // Predicated region
    $region34: #{tpu_custom_call.1} parent=1 // pred_check
      _
    $region35: #{tpu_custom_call.1} parent=1 // pred_check_branch
      %336 = sbr.rel (0) target = $region37
    $region36: #{tpu_custom_call.1} parent=1 // pred_region
      %337 = dma.done [#allocation3], 64
    $region37: #{tpu_custom_call.1} parent=1 // pred_fallthru
      _
    %338 = vsyncpa [#allocation3], 1

</llo_original>
